<compile_context>
chip_gen: v5e
topology: v5e:2x2
jax: 0.10.0
libtpu: 0.0.40
codegen_flags: <defaults>
</compile_context>

<pallas_src>
import functools

import jax
import jax.numpy as jnp
from jax.experimental import pallas as pl
from jax.experimental.pallas import tpu as pltpu

BN_EPS = 1e-5
LANE = 128          # lane width: pad weight output dims to multiples of this
SUBLANE_BF16 = 16   # bf16 packs (16, 128) per vreg -> batch tiles multiple of 16


def _round_up(n, m):
    return ((n + m - 1) // m) * m


def _cdiv(a, b):
    return -(-a // b)


def _sigmoid_exact(x):
    # Numerically stable sigmoid (exact divide) — used by the references.
    z = jnp.exp(-jnp.abs(x))
    inv = 1.0 / (1.0 + z)
    return jnp.where(x >= 0, inv, z * inv)


def _vmem_capacity_bytes():
    """Per-TensorCore VMEM capacity; conservative (v7x) fallback if unknown."""
    try:
        return int(pltpu.get_tpu_info().vmem_capacity_bytes)
    except Exception:
        return 64 << 20


# ----------------------------------------------------------------------------
# Kernel
# ----------------------------------------------------------------------------
def nnsolver_kernel(x_ref,
                    w1_ref, c1_ref,
                    w2_ref, c2_ref,
                    w3_ref, c3_ref,
                    o_ref, *, apply_sigmoid):
    """Fused eval-mode MLP: relu(x@W1'+c1) -> relu(.@W2'+c2) -> .@W3+c3 [-> sigmoid].

    Linear bias + BatchNorm1d (running stats) are pre-folded into W'/c.
    Matmul operands are bf16 (x's K dim left at its real size; the MXU zero-pads
    K internally); accumulation and elementwise math are f32.
    """
    h = jnp.dot(x_ref[...], w1_ref[...], preferred_element_type=jnp.float32)
    h = jnp.maximum(h + c1_ref[...], 0.0)                 # Dropout(eval): identity

    h = jnp.dot(h.astype(jnp.bfloat16), w2_ref[...],
                preferred_element_type=jnp.float32)
    h = jnp.maximum(h + c2_ref[...], 0.0)

    out = jnp.dot(h.astype(jnp.bfloat16), w3_ref[...],
                  preferred_element_type=jnp.float32) + c3_ref[...]
    if apply_sigmoid:                                     # probType == 'dc_wss'
        # Stable sigmoid; exp + approx reciprocal both issue on the EUP slot.
        z = jnp.exp(-jnp.abs(out))
        inv = pl.reciprocal(1.0 + z, approx=True)
        out = jnp.where(out >= 0, inv, z * inv)

    o_ref[...] = out.astype(o_ref.dtype)


# ----------------------------------------------------------------------------
# Tiling policy
# ----------------------------------------------------------------------------
def _choose_batch_tile(B, usable_vmem, const_bytes, per_row):
    """Pick (tb, num_tiles): biggest tile fitting the VMEM budget, >=2 grid
    steps when the batch allows (keeps both v7x TensorCores busy), and tb
    derived from the tile count so batch-padding waste stays <16 rows/tile."""
    tb_max = max(SUBLANE_BF16, (usable_vmem - const_bytes) // per_row)
    tb_max = min(tb_max, 4096)                    # amortizes ~0.35us per grid step
    tb_max = max((tb_max // SUBLANE_BF16) * SUBLANE_BF16, SUBLANE_BF16)

    num_tiles = _cdiv(B, tb_max)
    if num_tiles == 1 and B >= 2 * SUBLANE_BF16:  # give the second TC some work
        num_tiles = 2
    tb = min(_round_up(_cdiv(B, num_tiles), SUBLANE_BF16), tb_max)
    num_tiles = _cdiv(B, tb)
    return tb, num_tiles


# ----------------------------------------------------------------------------
# Wrapper
# ----------------------------------------------------------------------------
def nnsolver_forward(x, packed, *, apply_sigmoid=True, tb=None):
    """Run the fused kernel, tiling over the batch (x's feature dim stays unpadded)."""
    B, xdim = x.shape
    assert xdim == packed["xdim"]
    hid_p = packed["w1"].shape[1]
    out_p = packed["w3"].shape[1]
    out_dim = packed["out_dim"]

    vmem_cap = _vmem_capacity_bytes()
    usable = int(0.6 * vmem_cap)   # ~38 MiB on v7x (64 MiB), ~76 MiB on v5e/v6e (128 MiB)

    # Constant-operand residency (single-buffered via Buffered(1)).
    const_bytes = (2 * (xdim * hid_p + hid_p * hid_p + hid_p * out_p)   # bf16 W
                   + 4 * (2 * hid_p + out_p))                           # f32 c
    # Per-batch-row VMEM: x (bf16, 2 bufs) + out (bf16, 2 bufs) + generous
    # headroom for the in-kernel f32/bf16 hidden intermediates.
    per_row = 2 * xdim * 2 + 2 * out_p * 2 + 4 * hid_p * 4

    if tb is None:
        tb, num_tiles = _choose_batch_tile(B, usable, const_bytes, per_row)
    else:
        tb = _round_up(tb, SUBLANE_BF16)
        num_tiles = _cdiv(B, tb)
    Bp = num_tiles * tb

    # Batch-only pad; zeros are exact no-ops and the rows are sliced away.
    xb = x.astype(jnp.bfloat16)
    if Bp != B:
        xb = jnp.pad(xb, ((0, Bp - B), (0, 0)))

    # Explicit VMEM limit: at least the (conservative) estimate, capped near the
    # usable budget so we never over-subscribe v7x's 64 MiB.
    est = const_bytes + tb * per_row
    vmem_limit = int(min(max(16 << 20, 2 * est), max(usable, est + (4 << 20))))

    # Cost estimate so XLA can schedule around this small custom call.
    mm_macs = xdim * hid_p + hid_p * hid_p + hid_p * out_p
    cost = pl.CostEstimate(
        flops=2 * Bp * mm_macs,
        transcendentals=(Bp * out_p) if apply_sigmoid else 0,
        bytes_accessed=int(Bp * xdim * 2 + Bp * out_p * 2 + const_bytes))

    rep = lambda i: (0, 0)          # constant blocks: DMA'd once
    row = lambda i: (i, 0)          # activations: tiled over batch

    kernel = functools.partial(nnsolver_kernel, apply_sigmoid=apply_sigmoid)

    def build(const_pipeline_mode):
        def const_spec(shape):
            if const_pipeline_mode is None:
                return pl.BlockSpec(shape, rep)
            return pl.BlockSpec(shape, rep, pipeline_mode=const_pipeline_mode)
        return pl.pallas_call(
            kernel,
            out_shape=jax.ShapeDtypeStruct((Bp, out_p), jnp.bfloat16),
            grid_spec=pltpu.PrefetchScalarGridSpec(
                num_scalar_prefetch=0,
                grid=(num_tiles,),
                in_specs=[
                    pl.BlockSpec((tb, xdim), row),   # x: feature dim left unpadded
                    const_spec((xdim, hid_p)),       # W1' (bf16, bias+BN folded)
                    const_spec((1, hid_p)),          # c1  (f32)
                    const_spec((hid_p, hid_p)),      # W2' (bf16)
                    const_spec((1, hid_p)),          # c2  (f32)
                    const_spec((hid_p, out_p)),      # W3  (bf16)
                    const_spec((1, out_p)),          # c3  (f32)
                ],
                out_specs=pl.BlockSpec((tb, out_p), row),
            ),
            compiler_params=pltpu.CompilerParams(
                dimension_semantics=("parallel",),
                vmem_limit_bytes=vmem_limit),
            cost_estimate=cost,
        )

    args = (xb, packed["w1"], packed["c1"], packed["w2"], packed["c2"],
            packed["w3"], packed["c3"])
    try:
        # Constants single-buffered: fetched once, half the VMEM residency.
        out_padded = build(pl.Buffered(1))(*args)
    except Exception:
        # Fallback if this jax build rejects Buffered(1) on pallas_call inputs.
        out_padded = build(None)(*args)

    return out_padded[:B, :out_dim].astype(jnp.float32)


# ----------------------------------------------------------------------------
# Parameter init (mirrors the torch module) and packing (fold + pad + cast)
# ----------------------------------------------------------------------------
def init_raw_params(key, xdim, hidden, out_dim):
    """Torch-equivalent shapes/init; Linear weights stored pre-transposed (in, out)."""
    def linear(k, fan_in, fan_out):
        kw, kb = jax.random.split(k)
        std = (2.0 / fan_in) ** 0.5                    # kaiming_normal_, gain sqrt(2)
        w = std * jax.random.normal(kw, (fan_in, fan_out), jnp.float32)
        bound = 1.0 / (fan_in ** 0.5)                  # torch default bias init
        b = jax.random.uniform(kb, (fan_out,), jnp.float32, -bound, bound)
        return w, b

    def bn_init(n):
        return dict(gamma=jnp.ones((n,), jnp.float32),
                    beta=jnp.zeros((n,), jnp.float32),
                    mean=jnp.zeros((n,), jnp.float32),
                    var=jnp.ones((n,), jnp.float32))

    k1, k2, k3 = jax.random.split(key, 3)
    w1, b1 = linear(k1, xdim, hidden)
    w2, b2 = linear(k2, hidden, hidden)
    w3, b3 = linear(k3, hidden, out_dim)
    return dict(w1=w1, b1=b1, bn1=bn_init(hidden),
                w2=w2, b2=b2, bn2=bn_init(hidden),
                w3=w3, b3=b3,
                xdim=xdim, hidden=hidden, out_dim=out_dim)


def pack_params(raw):
    """Fold Linear bias + eval-mode BatchNorm into the weights, zero-pad the
    weight *output* dims to lane multiples (x's feature dim stays unpadded),
    and cast the matmul operands to bf16."""
    xdim, hidden, out_dim = raw["xdim"], raw["hidden"], raw["out_dim"]
    # v6e/v7x MXUs are 256x256: pad genuinely-large feature dims to 256 so a
    # full MXU pass is used; small dims stay at 128 (v5e native / lane width)
    # to avoid wasted FLOPs.
    hid_mult = 256 if hidden >= 256 else LANE
    out_mult = 256 if out_dim >= 256 else LANE
    hid_p = _round_up(hidden, hid_mult)
    out_p = _round_up(out_dim, out_mult)

    def fold(w, b, bn):
        scale = bn["gamma"] * jax.lax.rsqrt(bn["var"] + BN_EPS)      # (out,)
        shift = bn["beta"] - bn["mean"] * scale
        return w * scale[None, :], b * scale + shift

    w1, c1 = fold(raw["w1"], raw["b1"], raw["bn1"])
    w2, c2 = fold(raw["w2"], raw["b2"], raw["bn2"])
    w3, c3 = raw["w3"], raw["b3"]

    def pad_w(w, rows, cols):
        return jnp.pad(w, ((0, rows - w.shape[0]), (0, cols - w.shape[1])))

    def pad_c(c, cols):
        return jnp.pad(c, (0, cols - c.shape[0])).reshape(1, cols)

    return dict(
        w1=pad_w(w1, xdim, hid_p).astype(jnp.bfloat16),   # K dim = real xdim
        c1=pad_c(c1, hid_p),
        w2=pad_w(w2, hid_p, hid_p).astype(jnp.bfloat16),
        c2=pad_c(c2, hid_p),
        w3=pad_w(w3, hid_p, out_p).astype(jnp.bfloat16),
        c3=pad_c(c3, out_p),
        xdim=xdim, out_dim=out_dim)


# ----------------------------------------------------------------------------
# References
# ----------------------------------------------------------------------------
def reference_forward_packed(x, p):
    """Same math as the kernel (folded bf16 operands, f32 accumulate, exact
    sigmoid), computed with plain XLA ops — tight comparison target."""
    xb = x.astype(jnp.bfloat16)
    h = jnp.maximum(jnp.dot(xb, p["w1"], preferred_element_type=jnp.float32)
                    + p["c1"], 0.0)
    h = jnp.maximum(jnp.dot(h.astype(jnp.bfloat16), p["w2"],
                            preferred_element_type=jnp.float32) + p["c2"], 0.0)
    out = jnp.dot(h.astype(jnp.bfloat16), p["w3"],
                  preferred_element_type=jnp.float32) + p["c3"]
    return _sigmoid_exact(out)[:, :p["out_dim"]]


def reference_forward_f32(x, raw):
    """Full-precision eval-mode reference straight from the module spec."""
    def bn(h, bp):
        scale = bp["gamma"] * jax.lax.rsqrt(bp["var"] + BN_EPS)
        return (h - bp["mean"]) * scale + bp["beta"]
    h = jnp.maximum(bn(x @ raw["w1"] + raw["b1"], raw["bn1"]), 0.0)
    h = jnp.maximum(bn(h @ raw["w2"] + raw["b2"], raw["bn2"]), 0.0)
    out = h @ raw["w3"] + raw["b3"]
    return _sigmoid_exact(out)


if __name__ == "__main__":
    # Small shapes implied by the module: data.xdim, args['hiddenSize'],
    # output_dim = data.ydim - data.nknowns (useCompl=False).
    batch, xdim, hidden, out_dim = 8, 16, 32, 8

    key = jax.random.PRNGKey(0)
    kx, kp = jax.random.split(key)
    x = jax.random.normal(kx, (batch, xdim), jnp.float32)

    raw = init_raw_params(kp, xdim, hidden, out_dim)
    packed = pack_params(raw)

    out = nnsolver_forward(x, packed, apply_sigmoid=True)
    out = jax.block_until_ready(out)
    assert out.shape == (batch, out_dim)

    ref_tight = reference_forward_packed(x, packed)      # same bf16 math
    ref_f32 = reference_forward_f32(x, raw)              # full-precision spec
    # bf16 output + approx reciprocal -> slightly looser tolerances than before.
    assert jnp.allclose(out, ref_tight, atol=1.5e-2, rtol=1.5e-2), \
        "mismatch vs packed (bf16) reference"
    assert jnp.allclose(out, ref_f32, atol=3e-2, rtol=3e-2), \
        "mismatch vs f32 module reference"

    print("KERNEL_OK")
</pallas_src>

<mosaic_0001>
module attributes {stable_mosaic.version = 11 : i64} {
  func.func @nnsolver_kernel(%arg0: i32, %arg1: memref<16x16xbf16, #tpu.memory_space<vmem>>, %arg2: memref<16x128xbf16, #tpu.memory_space<vmem>>, %arg3: memref<1x128xf32, #tpu.memory_space<vmem>>, %arg4: memref<128x128xbf16, #tpu.memory_space<vmem>>, %arg5: memref<1x128xf32, #tpu.memory_space<vmem>>, %arg6: memref<128x128xbf16, #tpu.memory_space<vmem>>, %arg7: memref<1x128xf32, #tpu.memory_space<vmem>>, %arg8: memref<16x128xbf16, #tpu.memory_space<vmem>>) attributes {dimension_semantics = [#tpu.dimension_semantics<parallel>], iteration_bounds = array<i64: 1>, scalar_prefetch = 0 : i64, scratch_operands = 0 : i64, tpu.core_type = #tpu.core_type<tc>, window_params = [{transform_indices = @transform_0, window_bounds = array<i64: 16, 16>}, {pipeline_mode = #tpu.pipeline_mode<synchronous>, transform_indices = @transform_1, window_bounds = array<i64: 16, 128>}, {pipeline_mode = #tpu.pipeline_mode<synchronous>, transform_indices = @transform_2, window_bounds = array<i64: 1, 128>}, {pipeline_mode = #tpu.pipeline_mode<synchronous>, transform_indices = @transform_3, window_bounds = array<i64: 128, 128>}, {pipeline_mode = #tpu.pipeline_mode<synchronous>, transform_indices = @transform_4, window_bounds = array<i64: 1, 128>}, {pipeline_mode = #tpu.pipeline_mode<synchronous>, transform_indices = @transform_5, window_bounds = array<i64: 128, 128>}, {pipeline_mode = #tpu.pipeline_mode<synchronous>, transform_indices = @transform_6, window_bounds = array<i64: 1, 128>}, {transform_indices = @transform_7, window_bounds = array<i64: 16, 128>}]} {
    %c0 = arith.constant 0 : index
    %c0_0 = arith.constant 0 : index
    %0 = vector.load %arg1[%c0, %c0_0] : memref<16x16xbf16, #tpu.memory_space<vmem>>, vector<16x16xbf16>
    %c0_1 = arith.constant 0 : index
    %c0_2 = arith.constant 0 : index
    %1 = vector.load %arg2[%c0_1, %c0_2] : memref<16x128xbf16, #tpu.memory_space<vmem>>, vector<16x128xbf16>
    %cst = arith.constant dense<0.000000e+00> : vector<16x128xf32>
    %2 = tpu.matmul %0, %1, %cst {dimension_numbers = #tpu.dot_dimension_numbers<[1], [0], [0], [1], [0, 0, 1, 1], [], []>} : vector<16x16xbf16>, vector<16x128xbf16>, vector<16x128xf32> -> vector<16x128xf32>
    %c0_3 = arith.constant 0 : index
    %c0_4 = arith.constant 0 : index
    %3 = vector.load %arg3[%c0_3, %c0_4] : memref<1x128xf32, #tpu.memory_space<vmem>>, vector<1x128xf32>
    %4 = vector.broadcast %3 : vector<1x128xf32> to vector<16x128xf32>
    %5 = arith.addf %2, %4 : vector<16x128xf32>
    %cst_5 = arith.constant 0.000000e+00 : f32
    %6 = vector.broadcast %cst_5 : f32 to vector<16x128xf32>
    %7 = arith.maximumf %5, %6 : vector<16x128xf32>
    %8 = arith.truncf %7 : vector<16x128xf32> to vector<16x128xbf16>
    %c0_6 = arith.constant 0 : index
    %c0_7 = arith.constant 0 : index
    %9 = vector.load %arg4[%c0_6, %c0_7] : memref<128x128xbf16, #tpu.memory_space<vmem>>, vector<128x128xbf16>
    %cst_8 = arith.constant dense<0.000000e+00> : vector<16x128xf32>
    %10 = tpu.matmul %8, %9, %cst_8 {dimension_numbers = #tpu.dot_dimension_numbers<[1], [0], [0], [1], [0, 0, 1, 1], [], []>} : vector<16x128xbf16>, vector<128x128xbf16>, vector<16x128xf32> -> vector<16x128xf32>
    %c0_9 = arith.constant 0 : index
    %c0_10 = arith.constant 0 : index
    %11 = vector.load %arg5[%c0_9, %c0_10] : memref<1x128xf32, #tpu.memory_space<vmem>>, vector<1x128xf32>
    %12 = vector.broadcast %11 : vector<1x128xf32> to vector<16x128xf32>
    %13 = arith.addf %10, %12 : vector<16x128xf32>
    %cst_11 = arith.constant 0.000000e+00 : f32
    %14 = vector.broadcast %cst_11 : f32 to vector<16x128xf32>
    %15 = arith.maximumf %13, %14 : vector<16x128xf32>
    %16 = arith.truncf %15 : vector<16x128xf32> to vector<16x128xbf16>
    %c0_12 = arith.constant 0 : index
    %c0_13 = arith.constant 0 : index
    %17 = vector.load %arg6[%c0_12, %c0_13] : memref<128x128xbf16, #tpu.memory_space<vmem>>, vector<128x128xbf16>
    %cst_14 = arith.constant dense<0.000000e+00> : vector<16x128xf32>
    %18 = tpu.matmul %16, %17, %cst_14 {dimension_numbers = #tpu.dot_dimension_numbers<[1], [0], [0], [1], [0, 0, 1, 1], [], []>} : vector<16x128xbf16>, vector<128x128xbf16>, vector<16x128xf32> -> vector<16x128xf32>
    %c0_15 = arith.constant 0 : index
    %c0_16 = arith.constant 0 : index
    %19 = vector.load %arg7[%c0_15, %c0_16] : memref<1x128xf32, #tpu.memory_space<vmem>>, vector<1x128xf32>
    %20 = vector.broadcast %19 : vector<1x128xf32> to vector<16x128xf32>
    %21 = arith.addf %18, %20 : vector<16x128xf32>
    %22 = math.absf %21 : vector<16x128xf32>
    %cst_17 = arith.constant 0.000000e+00 : f32
    %23 = vector.broadcast %cst_17 : f32 to vector<16x128xf32>
    %24 = arith.subf %23, %22 : vector<16x128xf32>
    %25 = math.exp %24 : vector<16x128xf32>
    %cst_18 = arith.constant 1.000000e+00 : f32
    %26 = vector.broadcast %cst_18 : f32 to vector<16x128xf32>
    %27 = arith.addf %26, %25 : vector<16x128xf32>
    %28 = tpu.reciprocal %27 {approx = true} : vector<16x128xf32> -> vector<16x128xf32>
    %cst_19 = arith.constant 0.000000e+00 : f32
    %29 = vector.broadcast %cst_19 : f32 to vector<16x128xf32>
    %30 = arith.cmpf oge, %21, %29 : vector<16x128xf32>
    %31 = arith.mulf %25, %28 : vector<16x128xf32>
    %32 = arith.select %30, %28, %31 : vector<16x128xi1>, vector<16x128xf32>
    %33 = arith.truncf %32 : vector<16x128xf32> to vector<16x128xbf16>
    %c0_20 = arith.constant 0 : index
    %c0_21 = arith.constant 0 : index
    %34 = vector.load %arg8[%c0_20, %c0_21] : memref<16x128xbf16, #tpu.memory_space<vmem>>, vector<16x128xbf16>
    tpu.vector_store %arg8[%c0_20, %c0_21], %33 {strides = array<i32>} : memref<16x128xbf16, #tpu.memory_space<vmem>>, vector<16x128xbf16>,
    return
  }
  func.func @transform_0(%arg0: i32) -> (i32, i32) {
    %c0_i32 = arith.constant 0 : i32
    %c0_i32_0 = arith.constant 0 : i32
    return %arg0, %c0_i32 : i32, i32
  }
  func.func @transform_1(%arg0: i32) -> (i32, i32) {
    %c0_i32 = arith.constant 0 : i32
    %c0_i32_0 = arith.constant 0 : i32
    %c0_i32_1 = arith.constant 0 : i32
    return %c0_i32, %c0_i32_0 : i32, i32
  }
  func.func @transform_2(%arg0: i32) -> (i32, i32) {
    %c0_i32 = arith.constant 0 : i32
    %c0_i32_0 = arith.constant 0 : i32
    %c0_i32_1 = arith.constant 0 : i32
    return %c0_i32, %c0_i32_0 : i32, i32
  }
  func.func @transform_3(%arg0: i32) -> (i32, i32) {
    %c0_i32 = arith.constant 0 : i32
    %c0_i32_0 = arith.constant 0 : i32
    %c0_i32_1 = arith.constant 0 : i32
    return %c0_i32, %c0_i32_0 : i32, i32
  }
  func.func @transform_4(%arg0: i32) -> (i32, i32) {
    %c0_i32 = arith.constant 0 : i32
    %c0_i32_0 = arith.constant 0 : i32
    %c0_i32_1 = arith.constant 0 : i32
    return %c0_i32, %c0_i32_0 : i32, i32
  }
  func.func @transform_5(%arg0: i32) -> (i32, i32) {
    %c0_i32 = arith.constant 0 : i32
    %c0_i32_0 = arith.constant 0 : i32
    %c0_i32_1 = arith.constant 0 : i32
    return %c0_i32, %c0_i32_0 : i32, i32
  }
  func.func @transform_6(%arg0: i32) -> (i32, i32) {
    %c0_i32 = arith.constant 0 : i32
    %c0_i32_0 = arith.constant 0 : i32
    %c0_i32_1 = arith.constant 0 : i32
    return %c0_i32, %c0_i32_0 : i32, i32
  }
  func.func @transform_7(%arg0: i32) -> (i32, i32) {
    %c0_i32 = arith.constant 0 : i32
    %c0_i32_0 = arith.constant 0 : i32
    return %arg0, %c0_i32 : i32, i32
  }
}

module attributes {stable_mosaic.version = 11 : i64} {
  func.func @nnsolver_kernel(%arg0: i32, %arg1: memref<16x16xbf16, #tpu.memory_space<vmem>>, %arg2: memref<16x128xbf16, #tpu.memory_space<vmem>>, %arg3: memref<1x128xf32, #tpu.memory_space<vmem>>, %arg4: memref<128x128xbf16, #tpu.memory_space<vmem>>, %arg5: memref<1x128xf32, #tpu.memory_space<vmem>>, %arg6: memref<128x128xbf16, #tpu.memory_space<vmem>>, %arg7: memref<1x128xf32, #tpu.memory_space<vmem>>, %arg8: memref<16x128xbf16, #tpu.memory_space<vmem>>) attributes {dimension_semantics = [#tpu.dimension_semantics<parallel>], iteration_bounds = array<i64: 1>, scalar_prefetch = 0 : i64, scratch_operands = 0 : i64, tpu.core_type = #tpu.core_type<tc>, window_params = [{transform_indices = @transform_0, window_bounds = array<i64: 16, 16>}, {pipeline_mode = #tpu.pipeline_mode<synchronous>, transform_indices = @transform_1, window_bounds = array<i64: 16, 128>}, {pipeline_mode = #tpu.pipeline_mode<synchronous>, transform_indices = @transform_2, window_bounds = array<i64: 1, 128>}, {pipeline_mode = #tpu.pipeline_mode<synchronous>, transform_indices = @transform_3, window_bounds = array<i64: 128, 128>}, {pipeline_mode = #tpu.pipeline_mode<synchronous>, transform_indices = @transform_4, window_bounds = array<i64: 1, 128>}, {pipeline_mode = #tpu.pipeline_mode<synchronous>, transform_indices = @transform_5, window_bounds = array<i64: 128, 128>}, {pipeline_mode = #tpu.pipeline_mode<synchronous>, transform_indices = @transform_6, window_bounds = array<i64: 1, 128>}, {transform_indices = @transform_7, window_bounds = array<i64: 16, 128>}]} {
    %c0 = arith.constant 0 : index
    %c0_0 = arith.constant 0 : index
    %0 = vector.load %arg1[%c0, %c0_0] : memref<16x16xbf16, #tpu.memory_space<vmem>>, vector<16x16xbf16>
    %c0_1 = arith.constant 0 : index
    %c0_2 = arith.constant 0 : index
    %1 = vector.load %arg2[%c0_1, %c0_2] : memref<16x128xbf16, #tpu.memory_space<vmem>>, vector<16x128xbf16>
    %cst = arith.constant dense<0.000000e+00> : vector<16x128xf32>
    %2 = tpu.matmul %0, %1, %cst {dimension_numbers = #tpu.dot_dimension_numbers<[1], [0], [0], [1], [0, 0, 1, 1], [], []>} : vector<16x16xbf16>, vector<16x128xbf16>, vector<16x128xf32> -> vector<16x128xf32>
    %c0_3 = arith.constant 0 : index
    %c0_4 = arith.constant 0 : index
    %3 = vector.load %arg3[%c0_3, %c0_4] : memref<1x128xf32, #tpu.memory_space<vmem>>, vector<1x128xf32>
    %4 = vector.broadcast %3 : vector<1x128xf32> to vector<16x128xf32>
    %5 = arith.addf %2, %4 : vector<16x128xf32>
    %cst_5 = arith.constant 0.000000e+00 : f32
    %6 = vector.broadcast %cst_5 : f32 to vector<16x128xf32>
    %7 = arith.maximumf %5, %6 : vector<16x128xf32>
    %8 = arith.truncf %7 : vector<16x128xf32> to vector<16x128xbf16>
    %c0_6 = arith.constant 0 : index
    %c0_7 = arith.constant 0 : index
    %9 = vector.load %arg4[%c0_6, %c0_7] : memref<128x128xbf16, #tpu.memory_space<vmem>>, vector<128x128xbf16>
    %cst_8 = arith.constant dense<0.000000e+00> : vector<16x128xf32>
    %10 = tpu.matmul %8, %9, %cst_8 {dimension_numbers = #tpu.dot_dimension_numbers<[1], [0], [0], [1], [0, 0, 1, 1], [], []>} : vector<16x128xbf16>, vector<128x128xbf16>, vector<16x128xf32> -> vector<16x128xf32>
    %c0_9 = arith.constant 0 : index
    %c0_10 = arith.constant 0 : index
    %11 = vector.load %arg5[%c0_9, %c0_10] : memref<1x128xf32, #tpu.memory_space<vmem>>, vector<1x128xf32>
    %12 = vector.broadcast %11 : vector<1x128xf32> to vector<16x128xf32>
    %13 = arith.addf %10, %12 : vector<16x128xf32>
    %cst_11 = arith.constant 0.000000e+00 : f32
    %14 = vector.broadcast %cst_11 : f32 to vector<16x128xf32>
    %15 = arith.maximumf %13, %14 : vector<16x128xf32>
    %16 = arith.truncf %15 : vector<16x128xf32> to vector<16x128xbf16>
    %c0_12 = arith.constant 0 : index
    %c0_13 = arith.constant 0 : index
    %17 = vector.load %arg6[%c0_12, %c0_13] : memref<128x128xbf16, #tpu.memory_space<vmem>>, vector<128x128xbf16>
    %cst_14 = arith.constant dense<0.000000e+00> : vector<16x128xf32>
    %18 = tpu.matmul %16, %17, %cst_14 {dimension_numbers = #tpu.dot_dimension_numbers<[1], [0], [0], [1], [0, 0, 1, 1], [], []>} : vector<16x128xbf16>, vector<128x128xbf16>, vector<16x128xf32> -> vector<16x128xf32>
    %c0_15 = arith.constant 0 : index
    %c0_16 = arith.constant 0 : index
    %19 = vector.load %arg7[%c0_15, %c0_16] : memref<1x128xf32, #tpu.memory_space<vmem>>, vector<1x128xf32>
    %20 = vector.broadcast %19 : vector<1x128xf32> to vector<16x128xf32>
    %21 = arith.addf %18, %20 : vector<16x128xf32>
    %22 = math.absf %21 : vector<16x128xf32>
    %cst_17 = arith.constant 0.000000e+00 : f32
    %23 = vector.broadcast %cst_17 : f32 to vector<16x128xf32>
    %24 = arith.subf %23, %22 : vector<16x128xf32>
    %25 = math.exp %24 : vector<16x128xf32>
    %cst_18 = arith.constant 1.000000e+00 : f32
    %26 = vector.broadcast %cst_18 : f32 to vector<16x128xf32>
    %27 = arith.addf %26, %25 : vector<16x128xf32>
    %28 = tpu.reciprocal %27 {approx = true} : vector<16x128xf32> -> vector<16x128xf32>
    %cst_19 = arith.constant 0.000000e+00 : f32
    %29 = vector.broadcast %cst_19 : f32 to vector<16x128xf32>
    %30 = arith.cmpf oge, %21, %29 : vector<16x128xf32>
    %31 = arith.mulf %25, %28 : vector<16x128xf32>
    %32 = arith.select %30, %28, %31 : vector<16x128xi1>, vector<16x128xf32>
    %33 = arith.truncf %32 : vector<16x128xf32> to vector<16x128xbf16>
    %c0_20 = arith.constant 0 : index
    %c0_21 = arith.constant 0 : index
    %34 = vector.load %arg8[%c0_20, %c0_21] : memref<16x128xbf16, #tpu.memory_space<vmem>>, vector<16x128xbf16>
    tpu.vector_store %arg8[%c0_20, %c0_21], %33 {strides = array<i32>} : memref<16x128xbf16, #tpu.memory_space<vmem>>, vector<16x128xbf16>,
    return
  }
  func.func @transform_0(%arg0: i32) -> (i32, i32) {
    %c0_i32 = arith.constant 0 : i32
    %c0_i32_0 = arith.constant 0 : i32
    return %arg0, %c0_i32 : i32, i32
  }
  func.func @transform_1(%arg0: i32) -> (i32, i32) {
    %c0_i32 = arith.constant 0 : i32
    %c0_i32_0 = arith.constant 0 : i32
    %c0_i32_1 = arith.constant 0 : i32
    return %c0_i32, %c0_i32_0 : i32, i32
  }
  func.func @transform_2(%arg0: i32) -> (i32, i32) {
    %c0_i32 = arith.constant 0 : i32
    %c0_i32_0 = arith.constant 0 : i32
    %c0_i32_1 = arith.constant 0 : i32
    return %c0_i32, %c0_i32_0 : i32, i32
  }
  func.func @transform_3(%arg0: i32) -> (i32, i32) {
    %c0_i32 = arith.constant 0 : i32
    %c0_i32_0 = arith.constant 0 : i32
    %c0_i32_1 = arith.constant 0 : i32
    return %c0_i32, %c0_i32_0 : i32, i32
  }
  func.func @transform_4(%arg0: i32) -> (i32, i32) {
    %c0_i32 = arith.constant 0 : i32
    %c0_i32_0 = arith.constant 0 : i32
    %c0_i32_1 = arith.constant 0 : i32
    return %c0_i32, %c0_i32_0 : i32, i32
  }
  func.func @transform_5(%arg0: i32) -> (i32, i32) {
    %c0_i32 = arith.constant 0 : i32
    %c0_i32_0 = arith.constant 0 : i32
    %c0_i32_1 = arith.constant 0 : i32
    return %c0_i32, %c0_i32_0 : i32, i32
  }
  func.func @transform_6(%arg0: i32) -> (i32, i32) {
    %c0_i32 = arith.constant 0 : i32
    %c0_i32_0 = arith.constant 0 : i32
    %c0_i32_1 = arith.constant 0 : i32
    return %c0_i32, %c0_i32_0 : i32, i32
  }
  func.func @transform_7(%arg0: i32) -> (i32, i32) {
    %c0_i32 = arith.constant 0 : i32
    %c0_i32_0 = arith.constant 0 : i32
    return %arg0, %c0_i32 : i32, i32
  }
}

</mosaic_0001>

<llo_original>
// kernel: tpu_custom_call.1
$region0: #{tpu_custom_call.1}
  #allocation0 [shape = 'u32[]', space=smem, size = 0x4, offset = 0x4, fixed_abs, tag = 'smem constant byte address 0x4 - core index']
  #allocation1 [shape = 'u32[72,128]{1,0:T(1,128)}', space=vmem, size = 0x9000, scoped, tag = 'internal scratch']
  %s0 = inlined_call_operand.hbm [shape: bf16[16,16], index: 0, kind: input, shape index: {}]
  %s1 = inlined_call_operand.hbm [shape: bf16[16,128], index: 1, kind: input, shape index: {}]
  %s2 = inlined_call_operand.vmem [shape: f32[1,128], index: 2, kind: input, shape index: {}]
  %s3 = inlined_call_operand.hbm [shape: bf16[128,128], index: 3, kind: input, shape index: {}]
  %s4 = inlined_call_operand.vmem [shape: f32[1,128], index: 4, kind: input, shape index: {}]
  %s5 = inlined_call_operand.hbm [shape: bf16[128,128], index: 5, kind: input, shape index: {}]
  %s6 = inlined_call_operand.vmem [shape: f32[1,128], index: 6, kind: input, shape index: {}]
  %s7 = inlined_call_operand.hbm [shape: bf16[16,128], index: 7, kind: output, shape index: {}]
  %s8 = sld [smem:[#allocation0]]
  $region54: #{tpu_custom_call.1} parent=0
    _
  %s10 = ssub.s32 1, %s8
  %s11 = scalar_select 0, %s10, %s8
  $region1: #{tpu_custom_call.1} parent=0
    #allocation2 [shape = 'u8[4096]{0}', space=vmem, size = 0x1000, scoped, tag = 'input window, operand 0, single buffered']
    #allocation3 [shape = 's32[1]{0}', space=sflag, size = 0x4, scoped, tag = 'scoped memory for tpu_custom_call.1']
    #allocation4 [shape = 's32[1]{0}', space=sflag, size = 0x4, scoped, tag = 'scoped memory for tpu_custom_call.1']
    #allocation5 [shape = 'u8[4096]{0}', space=vmem, size = 0x1000, scoped, tag = 'input window, operand 1, single buffered']
    #allocation6 [shape = 's32[1]{0}', space=sflag, size = 0x4, scoped, tag = 'scoped memory for tpu_custom_call.1']
    #allocation7 [shape = 'u8[32768]{0}', space=vmem, size = 0x8000, scoped, tag = 'input window, operand 3, single buffered']
    #allocation8 [shape = 'u8[32768]{0}', space=vmem, size = 0x8000, scoped, tag = 'input window, operand 5, single buffered']
    #allocation9 [shape = 's32[1]{0}', space=sflag, size = 0x4, scoped, tag = 'scoped memory for tpu_custom_call.1']
    #allocation10 [shape = 'u8[4096]{0}', space=vmem, size = 0x1000, scoped, tag = 'output window, operand 0, single buffered']
    %12 = vsyncpa [#allocation3], 0
    %13 = vsyncpa [#allocation6], 0
    %14 = vsyncpa [#allocation9], 0
    %15 = vsyncpa [#allocation4], 0
    // Predicated region
    $region2: #{tpu_custom_call.1} parent=1 // pred_check
      _
    $region3: #{tpu_custom_call.1} parent=1 // pred_check_branch
      %17 = sbr.rel (0) target = $region5
    $region4: #{tpu_custom_call.1} parent=1 // pred_region
      %19 = vsyncadd [#allocation3], 0
      %s20 = sshll.u32 %s0, 4
      %s21 = int_to_ptr.hbm [resolvable:$true] %s20
      %s22 = sshll.u32 [#allocation2], 4
      %s23 = int_to_ptr.vmem [resolvable:$true] %s22
      %28 = dma.hbm_to_vmem [thread:$0]  %s21, 128, %s23, [#allocation3], 64, 64, 4
    $region5: #{tpu_custom_call.1} parent=1 // pred_fallthru
      _
    // Predicated region
    $region6: #{tpu_custom_call.1} parent=1 // pred_check
      _
    $region7: #{tpu_custom_call.1} parent=1 // pred_check_branch
      %30 = sbr.rel (0) target = $region9
    $region8: #{tpu_custom_call.1} parent=1 // pred_region
      %32 = vsyncadd [#allocation6], 0
      %s33 = sshll.u32 %s1, 4
      %s34 = int_to_ptr.hbm [resolvable:$true] %s33
      %s35 = sshll.u32 [#allocation5], 4
      %s36 = int_to_ptr.vmem [resolvable:$true] %s35
      %41 = dma.hbm_to_vmem [thread:$0]  %s34, 128, %s36, [#allocation6], 64, 64, 4
    $region9: #{tpu_custom_call.1} parent=1 // pred_fallthru
      _
    // Predicated region
    $region10: #{tpu_custom_call.1} parent=1 // pred_check
      _
    $region11: #{tpu_custom_call.1} parent=1 // pred_check_branch
      %43 = sbr.rel (0) target = $region13
    $region12: #{tpu_custom_call.1} parent=1 // pred_region
      _
    $region13: #{tpu_custom_call.1} parent=1 // pred_fallthru
      _
    // Predicated region
    $region14: #{tpu_custom_call.1} parent=1 // pred_check
      _
    $region15: #{tpu_custom_call.1} parent=1 // pred_check_branch
      %45 = sbr.rel (0) target = $region17
    $region16: #{tpu_custom_call.1} parent=1 // pred_region
      %47 = vsyncadd [#allocation6], 0
      %s48 = sshll.u32 %s3, 4
      %s49 = int_to_ptr.hbm [resolvable:$true] %s48
      %s50 = sshll.u32 [#allocation7], 4
      %s51 = int_to_ptr.vmem [resolvable:$true] %s50
      %56 = dma.hbm_to_vmem [thread:$0]  %s49, 1024, %s51, [#allocation6], 64, 64, 4
    $region17: #{tpu_custom_call.1} parent=1 // pred_fallthru
      _
    // Predicated region
    $region18: #{tpu_custom_call.1} parent=1 // pred_check
      _
    $region19: #{tpu_custom_call.1} parent=1 // pred_check_branch
      %58 = sbr.rel (0) target = $region21
    $region20: #{tpu_custom_call.1} parent=1 // pred_region
      _
    $region21: #{tpu_custom_call.1} parent=1 // pred_fallthru
      _
    // Predicated region
    $region22: #{tpu_custom_call.1} parent=1 // pred_check
      _
    $region23: #{tpu_custom_call.1} parent=1 // pred_check_branch
      %60 = sbr.rel (0) target = $region25
    $region24: #{tpu_custom_call.1} parent=1 // pred_region
      %62 = vsyncadd [#allocation9], 0
      %s63 = sshll.u32 %s5, 4
      %s64 = int_to_ptr.hbm [resolvable:$true] %s63
      %s65 = sshll.u32 [#allocation8], 4
      %s66 = int_to_ptr.vmem [resolvable:$true] %s65
      %71 = dma.hbm_to_vmem [thread:$0]  %s64, 1024, %s66, [#allocation9], 64, 64, 4
    $region25: #{tpu_custom_call.1} parent=1 // pred_fallthru
      _
    // Predicated region
    $region26: #{tpu_custom_call.1} parent=1 // pred_check
      _
    $region27: #{tpu_custom_call.1} parent=1 // pred_check_branch
      %73 = sbr.rel (0) target = $region29
    $region28: #{tpu_custom_call.1} parent=1 // pred_region
      _
    $region29: #{tpu_custom_call.1} parent=1 // pred_fallthru
      _
    // Predicated region
    $region30: #{tpu_custom_call.1} parent=1 // pred_check
      _
    $region31: #{tpu_custom_call.1} parent=1 // pred_check_branch
      %75 = sbr.rel (0) target = $region33
    $region32: #{tpu_custom_call.1} parent=1 // pred_region
      %77 = dma.done [#allocation3], 128
    $region33: #{tpu_custom_call.1} parent=1 // pred_fallthru
      _
    // Predicated region
    $region34: #{tpu_custom_call.1} parent=1 // pred_check
      _
    $region35: #{tpu_custom_call.1} parent=1 // pred_check_branch
      %79 = sbr.rel (0) target = $region37
    $region36: #{tpu_custom_call.1} parent=1 // pred_region
      %81 = dma.done [#allocation6], 128
    $region37: #{tpu_custom_call.1} parent=1 // pred_fallthru
      _
    // Predicated region
    $region38: #{tpu_custom_call.1} parent=1 // pred_check
      _
    $region39: #{tpu_custom_call.1} parent=1 // pred_check_branch
      %83 = sbr.rel (0) target = $region41
    $region40: #{tpu_custom_call.1} parent=1 // pred_region
      %85 = dma.done [#allocation6], 1024
    $region41: #{tpu_custom_call.1} parent=1 // pred_fallthru
      _
    // Predicated region
    $region42: #{tpu_custom_call.1} parent=1 // pred_check
      _
    $region43: #{tpu_custom_call.1} parent=1 // pred_check_branch
      %87 = sbr.rel (0) target = $region45
    $region44: #{tpu_custom_call.1} parent=1 // pred_region
      %89 = dma.done [#allocation9], 1024
    $region45: #{tpu_custom_call.1} parent=1 // pred_fallthru
      _
    %v91 = vld [vmem:[#allocation2] sm:$0xf]
    %v92 = vld [vmem:[#allocation2 + $0x4] sm:$0xf]
    %v93 = vld [vmem:[#allocation5] sm:$0xf]
    %v94 = vld [vmem:[#allocation5 + $0x4] sm:$0xf]
    %v95 = vld [vmem:[%s2] sm:$0x1]
    %v97 = vperm.slane %v95, 0
    %v101 = vunpack.c.l.b16 %v91
    %v102 = vunpack.c.l.b16 %v92
    %v103 = vpack.c.b16 %v102, %v101
    %v106 = vunpack.c.l.b16 %v93
    %v107 = vunpack.c.l.b16 %v94
    %v108 = vpack.c.b16 %v107, %v106
    %vm110 = vcmask 130048
    %v112 = vsel %vm110, %v103, 0
    %114 = vmatpush.bf16.msra.mxu0 0
    %115 = vmatpush.bf16.msra.mxu0 0
    %116 = vmatpush.bf16.msra.mxu0 0
    %117 = vmatpush.bf16.msra.mxu0 0
    %118 = vmatpush.bf16.msra.mxu0 0
    %119 = vmatpush.bf16.msra.mxu0 0
    %120 = vmatpush.bf16.msra.mxu0 0
    %121 = vmatpush.bf16.msra.mxu0 %v108
    %122 = vmatmul.bf16.gmra.mxu0 %v112
    %v123 = vpop.f32.mrf.mxu0
    %v124 = vadd.f32 %v97, %v123
    %v125 = vpop.f32.mrf.mxu0
    %v126 = vadd.f32 %v97, %v125
    %127 = vdwg.mxu0
    %v128 = vmax.f32 %v124, 0.0
    %v129 = vmax.f32 %v126, 0.0
    %v130 = vpack.c.bf16 %v129, %v128
    %v131 = vld [vmem:[#allocation7] sm:$0xf]
    %v132 = vld [vmem:[#allocation7 + $0x4] sm:$0xf]
    %v133 = vld [vmem:[#allocation7 + $0x8] sm:$0xf]
    %v134 = vld [vmem:[#allocation7 + $0xc] sm:$0xf]
    %v135 = vld [vmem:[#allocation7 + $0x10] sm:$0xf]
    %v136 = vld [vmem:[#allocation7 + $0x14] sm:$0xf]
    %v137 = vld [vmem:[#allocation7 + $0x18] sm:$0xf]
    %v138 = vld [vmem:[#allocation7 + $0x1c] sm:$0xf]
    %v139 = vld [vmem:[#allocation7 + $0x20] sm:$0xf]
    %v140 = vld [vmem:[#allocation7 + $0x24] sm:$0xf]
    %v141 = vld [vmem:[#allocation7 + $0x28] sm:$0xf]
    %v142 = vld [vmem:[#allocation7 + $0x2c] sm:$0xf]
    %v143 = vld [vmem:[#allocation7 + $0x30] sm:$0xf]
    %v144 = vld [vmem:[#allocation7 + $0x34] sm:$0xf]
    %v145 = vld [vmem:[#allocation7 + $0x38] sm:$0xf]
    %v146 = vld [vmem:[#allocation7 + $0x3c] sm:$0xf]
    %v147 = vld [vmem:[%s4] sm:$0x1]
    %v149 = vperm.slane %v147, 0
    %v167 = vunpack.c.l.b16 %v131
    %v168 = vunpack.c.l.b16 %v132
    %v169 = vunpack.c.l.b16 %v133
    %v170 = vunpack.c.l.b16 %v134
    %v171 = vunpack.c.l.b16 %v135
    %v172 = vunpack.c.l.b16 %v136
    %v173 = vunpack.c.l.b16 %v137
    %v174 = vunpack.c.l.b16 %v138
    %v175 = vunpack.c.l.b16 %v139
    %v176 = vunpack.c.l.b16 %v140
    %v177 = vunpack.c.l.b16 %v141
    %v178 = vunpack.c.l.b16 %v142
    %v179 = vunpack.c.l.b16 %v143
    %v180 = vunpack.c.l.b16 %v144
    %v181 = vunpack.c.l.b16 %v145
    %v182 = vunpack.c.l.b16 %v146
    %v183 = vpack.c.b16 %v168, %v167
    %v184 = vpack.c.b16 %v170, %v169
    %v185 = vpack.c.b16 %v172, %v171
    %v186 = vpack.c.b16 %v174, %v173
    %v187 = vpack.c.b16 %v176, %v175
    %v188 = vpack.c.b16 %v178, %v177
    %v189 = vpack.c.b16 %v180, %v179
    %v190 = vpack.c.b16 %v182, %v181
    %199 = vmatpush.bf16.msra.mxu0 %v190
    %200 = vmatpush.bf16.msra.mxu0 %v189
    %201 = vmatpush.bf16.msra.mxu0 %v188
    %202 = vmatpush.bf16.msra.mxu0 %v187
    %203 = vmatpush.bf16.msra.mxu0 %v186
    %204 = vmatpush.bf16.msra.mxu0 %v185
    %205 = vmatpush.bf16.msra.mxu0 %v184
    %206 = vmatpush.bf16.msra.mxu0 %v183
    %207 = vmatmul.bf16.gmra.mxu0 %v130
    %v208 = vpop.f32.mrf.mxu0
    %v209 = vadd.f32 %v149, %v208
    %v210 = vpop.f32.mrf.mxu0
    %v211 = vadd.f32 %v149, %v210
    %212 = vdwg.mxu0
    %v213 = vmax.f32 %v209, 0.0
    %v214 = vmax.f32 %v211, 0.0
    %v215 = vpack.c.bf16 %v214, %v213
    %v216 = vld [vmem:[#allocation8] sm:$0xf]
    %v217 = vld [vmem:[#allocation8 + $0x4] sm:$0xf]
    %v218 = vld [vmem:[#allocation8 + $0x8] sm:$0xf]
    %v219 = vld [vmem:[#allocation8 + $0xc] sm:$0xf]
    %v220 = vld [vmem:[#allocation8 + $0x10] sm:$0xf]
    %v221 = vld [vmem:[#allocation8 + $0x14] sm:$0xf]
    %v222 = vld [vmem:[#allocation8 + $0x18] sm:$0xf]
    %v223 = vld [vmem:[#allocation8 + $0x1c] sm:$0xf]
    %v224 = vld [vmem:[#allocation8 + $0x20] sm:$0xf]
    %v225 = vld [vmem:[#allocation8 + $0x24] sm:$0xf]
    %v226 = vld [vmem:[#allocation8 + $0x28] sm:$0xf]
    %v227 = vld [vmem:[#allocation8 + $0x2c] sm:$0xf]
    %v228 = vld [vmem:[#allocation8 + $0x30] sm:$0xf]
    %v229 = vld [vmem:[#allocation8 + $0x34] sm:$0xf]
    %v230 = vld [vmem:[#allocation8 + $0x38] sm:$0xf]
    %v231 = vld [vmem:[#allocation8 + $0x3c] sm:$0xf]
    %v232 = vld [vmem:[%s6] sm:$0x1]
    %v234 = vperm.slane %v232, 0
    %v252 = vunpack.c.l.b16 %v216
    %v253 = vunpack.c.l.b16 %v217
    %v254 = vunpack.c.l.b16 %v218
    %v255 = vunpack.c.l.b16 %v219
    %v256 = vunpack.c.l.b16 %v220
    %v257 = vunpack.c.l.b16 %v221
    %v258 = vunpack.c.l.b16 %v222
    %v259 = vunpack.c.l.b16 %v223
    %v260 = vunpack.c.l.b16 %v224
    %v261 = vunpack.c.l.b16 %v225
    %v262 = vunpack.c.l.b16 %v226
    %v263 = vunpack.c.l.b16 %v227
    %v264 = vunpack.c.l.b16 %v228
    %v265 = vunpack.c.l.b16 %v229
    %v266 = vunpack.c.l.b16 %v230
    %v267 = vunpack.c.l.b16 %v231
    %v268 = vpack.c.b16 %v253, %v252
    %v269 = vpack.c.b16 %v255, %v254
    %v270 = vpack.c.b16 %v257, %v256
    %v271 = vpack.c.b16 %v259, %v258
    %v272 = vpack.c.b16 %v261, %v260
    %v273 = vpack.c.b16 %v263, %v262
    %v274 = vpack.c.b16 %v265, %v264
    %v275 = vpack.c.b16 %v267, %v266
    %284 = vmatpush.bf16.msra.mxu0 %v275
    %285 = vmatpush.bf16.msra.mxu0 %v274
    %286 = vmatpush.bf16.msra.mxu0 %v273
    %287 = vmatpush.bf16.msra.mxu0 %v272
    %288 = vmatpush.bf16.msra.mxu0 %v271
    %289 = vmatpush.bf16.msra.mxu0 %v270
    %290 = vmatpush.bf16.msra.mxu0 %v269
    %291 = vmatpush.bf16.msra.mxu0 %v268
    %292 = vmatmul.bf16.gmra.mxu0 %v215
    %v293 = vpop.f32.mrf.mxu0
    %v294 = vadd.f32 %v234, %v293
    %v295 = vpop.f32.mrf.mxu0
    %v296 = vadd.f32 %v234, %v295
    %297 = vdwg.mxu0
    %v298 = vand.u32 2147483647, %v294
    %v299 = vand.u32 2147483647, %v296
    %v300 = vsub.f32 0.0, %v298
    %v301 = vsub.f32 0.0, %v299
    %v302 = vmul.f32 %v300, 1.442695
    %v303 = vpow.pop %v302
    %v304 = vmul.f32 %v301, 1.442695
    %v305 = vpow.pop %v304
    %v306 = vadd.f32 %v303, 1.0
    %v307 = vadd.f32 %v305, 1.0
    %v308 = vrcp.pop %v306
    %v309 = vrcp.pop %v307
    %vm310 = vcmp.ge.f32.partialorder %v294, 0.0
    %vm311 = vcmp.ge.f32.partialorder %v296, 0.0
    %v312 = vmul.f32 %v303, %v308
    %v313 = vmul.f32 %v305, %v309
    %v314 = vsel %vm310, %v308, %v312
    %v315 = vsel %vm311, %v309, %v313
    %v316 = vpack.c.bf16 %v314, %v314
    %v317 = vpack.c.bf16 %v315, %v315
    %318 = vst [vmem:[#allocation10] sm:$0xf] %v316
    %319 = vst [vmem:[#allocation10 + $0x4] sm:$0xf] %v317
    // Predicated region
    $region46: #{tpu_custom_call.1} parent=1 // pred_check
      _
    $region47: #{tpu_custom_call.1} parent=1 // pred_check_branch
      %321 = sbr.rel (0) target = $region49
    $region48: #{tpu_custom_call.1} parent=1 // pred_region
      %323 = vsyncadd [#allocation4], 0
      %s324 = sshll.u32 [#allocation10], 4
      %s325 = int_to_ptr.vmem [resolvable:$true] %s324
      %s326 = sshll.u32 %s7, 4
      %s327 = int_to_ptr.hbm [resolvable:$true] %s326
      %332 = dma.vmem_to_hbm [thread:$0]  %s325, 128, %s327, [#allocation4], 64, 64, 4
    $region49: #{tpu_custom_call.1} parent=1 // pred_fallthru
      _
    // Predicated region
    $region50: #{tpu_custom_call.1} parent=1 // pred_check
      _
    $region51: #{tpu_custom_call.1} parent=1 // pred_check_branch
      %334 = sbr.rel (0) target = $region53
    $region52: #{tpu_custom_call.1} parent=1 // pred_region
      %336 = dma.done [#allocation4], 128
    $region53: #{tpu_custom_call.1} parent=1 // pred_fallthru
      _
    %337 = vsyncpa [#allocation3], 1
    %338 = vsyncpa [#allocation6], 1
    %339 = vsyncpa [#allocation9], 1
    %340 = vsyncpa [#allocation4], 1

// kernel: tpu_custom_call.1
$region0: #{tpu_custom_call.1}
  #allocation0 [shape = 'u32[]', space=smem, size = 0x4, offset = 0x4, fixed_abs, tag = 'smem constant byte address 0x4 - core index']
  #allocation1 [shape = 'u32[72,128]{1,0:T(1,128)}', space=vmem, size = 0x9000, scoped, tag = 'internal scratch']
  %s0 = inlined_call_operand.hbm [shape: bf16[16,16], index: 0, kind: input, shape index: {}]
  %s1 = inlined_call_operand.hbm [shape: bf16[16,128], index: 1, kind: input, shape index: {}]
  %s2 = inlined_call_operand.vmem [shape: f32[1,128], index: 2, kind: input, shape index: {}]
  %s3 = inlined_call_operand.hbm [shape: bf16[128,128], index: 3, kind: input, shape index: {}]
  %s4 = inlined_call_operand.vmem [shape: f32[1,128], index: 4, kind: input, shape index: {}]
  %s5 = inlined_call_operand.hbm [shape: bf16[128,128], index: 5, kind: input, shape index: {}]
  %s6 = inlined_call_operand.vmem [shape: f32[1,128], index: 6, kind: input, shape index: {}]
  %s7 = inlined_call_operand.hbm [shape: bf16[16,128], index: 7, kind: output, shape index: {}]
  %s8 = sld [smem:[#allocation0]]
  $region54: #{tpu_custom_call.1} parent=0
    _
  %s10 = ssub.s32 1, %s8
  %s11 = scalar_select 0, %s10, %s8
  $region1: #{tpu_custom_call.1} parent=0
    #allocation2 [shape = 'u8[4096]{0}', space=vmem, size = 0x1000, scoped, tag = 'input window, operand 0, single buffered']
    #allocation3 [shape = 's32[1]{0}', space=sflag, size = 0x4, scoped, tag = 'scoped memory for tpu_custom_call.1']
    #allocation4 [shape = 's32[1]{0}', space=sflag, size = 0x4, scoped, tag = 'scoped memory for tpu_custom_call.1']
    #allocation5 [shape = 'u8[4096]{0}', space=vmem, size = 0x1000, scoped, tag = 'input window, operand 1, single buffered']
    #allocation6 [shape = 's32[1]{0}', space=sflag, size = 0x4, scoped, tag = 'scoped memory for tpu_custom_call.1']
    #allocation7 [shape = 'u8[32768]{0}', space=vmem, size = 0x8000, scoped, tag = 'input window, operand 3, single buffered']
    #allocation8 [shape = 'u8[32768]{0}', space=vmem, size = 0x8000, scoped, tag = 'input window, operand 5, single buffered']
    #allocation9 [shape = 's32[1]{0}', space=sflag, size = 0x4, scoped, tag = 'scoped memory for tpu_custom_call.1']
    #allocation10 [shape = 'u8[4096]{0}', space=vmem, size = 0x1000, scoped, tag = 'output window, operand 0, single buffered']
    %12 = vsyncpa [#allocation3], 0
    %13 = vsyncpa [#allocation6], 0
    %14 = vsyncpa [#allocation9], 0
    %15 = vsyncpa [#allocation4], 0
    // Predicated region
    $region2: #{tpu_custom_call.1} parent=1 // pred_check
      _
    $region3: #{tpu_custom_call.1} parent=1 // pred_check_branch
      %17 = sbr.rel (0) target = $region5
    $region4: #{tpu_custom_call.1} parent=1 // pred_region
      %19 = vsyncadd [#allocation3], 0
      %s20 = sshll.u32 %s0, 4
      %s21 = int_to_ptr.hbm [resolvable:$true] %s20
      %s22 = sshll.u32 [#allocation2], 4
      %s23 = int_to_ptr.vmem [resolvable:$true] %s22
      %28 = dma.hbm_to_vmem [thread:$0]  %s21, 128, %s23, [#allocation3], 64, 64, 4
    $region5: #{tpu_custom_call.1} parent=1 // pred_fallthru
      _
    // Predicated region
    $region6: #{tpu_custom_call.1} parent=1 // pred_check
      _
    $region7: #{tpu_custom_call.1} parent=1 // pred_check_branch
      %30 = sbr.rel (0) target = $region9
    $region8: #{tpu_custom_call.1} parent=1 // pred_region
      %32 = vsyncadd [#allocation6], 0
      %s33 = sshll.u32 %s1, 4
      %s34 = int_to_ptr.hbm [resolvable:$true] %s33
      %s35 = sshll.u32 [#allocation5], 4
      %s36 = int_to_ptr.vmem [resolvable:$true] %s35
      %41 = dma.hbm_to_vmem [thread:$0]  %s34, 128, %s36, [#allocation6], 64, 64, 4
    $region9: #{tpu_custom_call.1} parent=1 // pred_fallthru
      _
    // Predicated region
    $region10: #{tpu_custom_call.1} parent=1 // pred_check
      _
    $region11: #{tpu_custom_call.1} parent=1 // pred_check_branch
      %43 = sbr.rel (0) target = $region13
    $region12: #{tpu_custom_call.1} parent=1 // pred_region
      _
    $region13: #{tpu_custom_call.1} parent=1 // pred_fallthru
      _
    // Predicated region
    $region14: #{tpu_custom_call.1} parent=1 // pred_check
      _
    $region15: #{tpu_custom_call.1} parent=1 // pred_check_branch
      %45 = sbr.rel (0) target = $region17
    $region16: #{tpu_custom_call.1} parent=1 // pred_region
      %47 = vsyncadd [#allocation6], 0
      %s48 = sshll.u32 %s3, 4
      %s49 = int_to_ptr.hbm [resolvable:$true] %s48
      %s50 = sshll.u32 [#allocation7], 4
      %s51 = int_to_ptr.vmem [resolvable:$true] %s50
      %56 = dma.hbm_to_vmem [thread:$0]  %s49, 1024, %s51, [#allocation6], 64, 64, 4
    $region17: #{tpu_custom_call.1} parent=1 // pred_fallthru
      _
    // Predicated region
    $region18: #{tpu_custom_call.1} parent=1 // pred_check
      _
    $region19: #{tpu_custom_call.1} parent=1 // pred_check_branch
      %58 = sbr.rel (0) target = $region21
    $region20: #{tpu_custom_call.1} parent=1 // pred_region
      _
    $region21: #{tpu_custom_call.1} parent=1 // pred_fallthru
      _
    // Predicated region
    $region22: #{tpu_custom_call.1} parent=1 // pred_check
      _
    $region23: #{tpu_custom_call.1} parent=1 // pred_check_branch
      %60 = sbr.rel (0) target = $region25
    $region24: #{tpu_custom_call.1} parent=1 // pred_region
      %62 = vsyncadd [#allocation9], 0
      %s63 = sshll.u32 %s5, 4
      %s64 = int_to_ptr.hbm [resolvable:$true] %s63
      %s65 = sshll.u32 [#allocation8], 4
      %s66 = int_to_ptr.vmem [resolvable:$true] %s65
      %71 = dma.hbm_to_vmem [thread:$0]  %s64, 1024, %s66, [#allocation9], 64, 64, 4
    $region25: #{tpu_custom_call.1} parent=1 // pred_fallthru
      _
    // Predicated region
    $region26: #{tpu_custom_call.1} parent=1 // pred_check
      _
    $region27: #{tpu_custom_call.1} parent=1 // pred_check_branch
      %73 = sbr.rel (0) target = $region29
    $region28: #{tpu_custom_call.1} parent=1 // pred_region
      _
    $region29: #{tpu_custom_call.1} parent=1 // pred_fallthru
      _
    // Predicated region
    $region30: #{tpu_custom_call.1} parent=1 // pred_check
      _
    $region31: #{tpu_custom_call.1} parent=1 // pred_check_branch
      %75 = sbr.rel (0) target = $region33
    $region32: #{tpu_custom_call.1} parent=1 // pred_region
      %77 = dma.done [#allocation3], 128
    $region33: #{tpu_custom_call.1} parent=1 // pred_fallthru
      _
    // Predicated region
    $region34: #{tpu_custom_call.1} parent=1 // pred_check
      _
    $region35: #{tpu_custom_call.1} parent=1 // pred_check_branch
      %79 = sbr.rel (0) target = $region37
    $region36: #{tpu_custom_call.1} parent=1 // pred_region
      %81 = dma.done [#allocation6], 128
    $region37: #{tpu_custom_call.1} parent=1 // pred_fallthru
      _
    // Predicated region
    $region38: #{tpu_custom_call.1} parent=1 // pred_check
      _
    $region39: #{tpu_custom_call.1} parent=1 // pred_check_branch
      %83 = sbr.rel (0) target = $region41
    $region40: #{tpu_custom_call.1} parent=1 // pred_region
      %85 = dma.done [#allocation6], 1024
    $region41: #{tpu_custom_call.1} parent=1 // pred_fallthru
      _
    // Predicated region
    $region42: #{tpu_custom_call.1} parent=1 // pred_check
      _
    $region43: #{tpu_custom_call.1} parent=1 // pred_check_branch
      %87 = sbr.rel (0) target = $region45
    $region44: #{tpu_custom_call.1} parent=1 // pred_region
      %89 = dma.done [#allocation9], 1024
    $region45: #{tpu_custom_call.1} parent=1 // pred_fallthru
      _
    %v91 = vld [vmem:[#allocation2] sm:$0xf]
    %v92 = vld [vmem:[#allocation2 + $0x4] sm:$0xf]
    %v93 = vld [vmem:[#allocation5] sm:$0xf]
    %v94 = vld [vmem:[#allocation5 + $0x4] sm:$0xf]
    %v95 = vld [vmem:[%s2] sm:$0x1]
    %v97 = vperm.slane %v95, 0
    %v101 = vunpack.c.l.b16 %v91
    %v102 = vunpack.c.l.b16 %v92
    %v103 = vpack.c.b16 %v102, %v101
    %v106 = vunpack.c.l.b16 %v93
    %v107 = vunpack.c.l.b16 %v94
    %v108 = vpack.c.b16 %v107, %v106
    %vm110 = vcmask 130048
    %v112 = vsel %vm110, %v103, 0
    %114 = vmatpush.bf16.msra.mxu0 0
    %115 = vmatpush.bf16.msra.mxu0 0
    %116 = vmatpush.bf16.msra.mxu0 0
    %117 = vmatpush.bf16.msra.mxu0 0
    %118 = vmatpush.bf16.msra.mxu0 0
    %119 = vmatpush.bf16.msra.mxu0 0
    %120 = vmatpush.bf16.msra.mxu0 0
    %121 = vmatpush.bf16.msra.mxu0 %v108
    %122 = vmatmul.bf16.gmra.mxu0 %v112
    %v123 = vpop.f32.mrf.mxu0
    %v124 = vadd.f32 %v97, %v123
    %v125 = vpop.f32.mrf.mxu0
    %v126 = vadd.f32 %v97, %v125
    %127 = vdwg.mxu0
    %v128 = vmax.f32 %v124, 0.0
    %v129 = vmax.f32 %v126, 0.0
    %v130 = vpack.c.bf16 %v129, %v128
    %v131 = vld [vmem:[#allocation7] sm:$0xf]
    %v132 = vld [vmem:[#allocation7 + $0x4] sm:$0xf]
    %v133 = vld [vmem:[#allocation7 + $0x8] sm:$0xf]
    %v134 = vld [vmem:[#allocation7 + $0xc] sm:$0xf]
    %v135 = vld [vmem:[#allocation7 + $0x10] sm:$0xf]
    %v136 = vld [vmem:[#allocation7 + $0x14] sm:$0xf]
    %v137 = vld [vmem:[#allocation7 + $0x18] sm:$0xf]
    %v138 = vld [vmem:[#allocation7 + $0x1c] sm:$0xf]
    %v139 = vld [vmem:[#allocation7 + $0x20] sm:$0xf]
    %v140 = vld [vmem:[#allocation7 + $0x24] sm:$0xf]
    %v141 = vld [vmem:[#allocation7 + $0x28] sm:$0xf]
    %v142 = vld [vmem:[#allocation7 + $0x2c] sm:$0xf]
    %v143 = vld [vmem:[#allocation7 + $0x30] sm:$0xf]
    %v144 = vld [vmem:[#allocation7 + $0x34] sm:$0xf]
    %v145 = vld [vmem:[#allocation7 + $0x38] sm:$0xf]
    %v146 = vld [vmem:[#allocation7 + $0x3c] sm:$0xf]
    %v147 = vld [vmem:[%s4] sm:$0x1]
    %v149 = vperm.slane %v147, 0
    %v167 = vunpack.c.l.b16 %v131
    %v168 = vunpack.c.l.b16 %v132
    %v169 = vunpack.c.l.b16 %v133
    %v170 = vunpack.c.l.b16 %v134
    %v171 = vunpack.c.l.b16 %v135
    %v172 = vunpack.c.l.b16 %v136
    %v173 = vunpack.c.l.b16 %v137
    %v174 = vunpack.c.l.b16 %v138
    %v175 = vunpack.c.l.b16 %v139
    %v176 = vunpack.c.l.b16 %v140
    %v177 = vunpack.c.l.b16 %v141
    %v178 = vunpack.c.l.b16 %v142
    %v179 = vunpack.c.l.b16 %v143
    %v180 = vunpack.c.l.b16 %v144
    %v181 = vunpack.c.l.b16 %v145
    %v182 = vunpack.c.l.b16 %v146
    %v183 = vpack.c.b16 %v168, %v167
    %v184 = vpack.c.b16 %v170, %v169
    %v185 = vpack.c.b16 %v172, %v171
    %v186 = vpack.c.b16 %v174, %v173
    %v187 = vpack.c.b16 %v176, %v175
    %v188 = vpack.c.b16 %v178, %v177
    %v189 = vpack.c.b16 %v180, %v179
    %v190 = vpack.c.b16 %v182, %v181
    %199 = vmatpush.bf16.msra.mxu0 %v190
    %200 = vmatpush.bf16.msra.mxu0 %v189
    %201 = vmatpush.bf16.msra.mxu0 %v188
    %202 = vmatpush.bf16.msra.mxu0 %v187
    %203 = vmatpush.bf16.msra.mxu0 %v186
    %204 = vmatpush.bf16.msra.mxu0 %v185
    %205 = vmatpush.bf16.msra.mxu0 %v184
    %206 = vmatpush.bf16.msra.mxu0 %v183
    %207 = vmatmul.bf16.gmra.mxu0 %v130
    %v208 = vpop.f32.mrf.mxu0
    %v209 = vadd.f32 %v149, %v208
    %v210 = vpop.f32.mrf.mxu0
    %v211 = vadd.f32 %v149, %v210
    %212 = vdwg.mxu0
    %v213 = vmax.f32 %v209, 0.0
    %v214 = vmax.f32 %v211, 0.0
    %v215 = vpack.c.bf16 %v214, %v213
    %v216 = vld [vmem:[#allocation8] sm:$0xf]
    %v217 = vld [vmem:[#allocation8 + $0x4] sm:$0xf]
    %v218 = vld [vmem:[#allocation8 + $0x8] sm:$0xf]
    %v219 = vld [vmem:[#allocation8 + $0xc] sm:$0xf]
    %v220 = vld [vmem:[#allocation8 + $0x10] sm:$0xf]
    %v221 = vld [vmem:[#allocation8 + $0x14] sm:$0xf]
    %v222 = vld [vmem:[#allocation8 + $0x18] sm:$0xf]
    %v223 = vld [vmem:[#allocation8 + $0x1c] sm:$0xf]
    %v224 = vld [vmem:[#allocation8 + $0x20] sm:$0xf]
    %v225 = vld [vmem:[#allocation8 + $0x24] sm:$0xf]
    %v226 = vld [vmem:[#allocation8 + $0x28] sm:$0xf]
    %v227 = vld [vmem:[#allocation8 + $0x2c] sm:$0xf]
    %v228 = vld [vmem:[#allocation8 + $0x30] sm:$0xf]
    %v229 = vld [vmem:[#allocation8 + $0x34] sm:$0xf]
    %v230 = vld [vmem:[#allocation8 + $0x38] sm:$0xf]
    %v231 = vld [vmem:[#allocation8 + $0x3c] sm:$0xf]
    %v232 = vld [vmem:[%s6] sm:$0x1]
    %v234 = vperm.slane %v232, 0
    %v252 = vunpack.c.l.b16 %v216
    %v253 = vunpack.c.l.b16 %v217
    %v254 = vunpack.c.l.b16 %v218
    %v255 = vunpack.c.l.b16 %v219
    %v256 = vunpack.c.l.b16 %v220
    %v257 = vunpack.c.l.b16 %v221
    %v258 = vunpack.c.l.b16 %v222
    %v259 = vunpack.c.l.b16 %v223
    %v260 = vunpack.c.l.b16 %v224
    %v261 = vunpack.c.l.b16 %v225
    %v262 = vunpack.c.l.b16 %v226
    %v263 = vunpack.c.l.b16 %v227
    %v264 = vunpack.c.l.b16 %v228
    %v265 = vunpack.c.l.b16 %v229
    %v266 = vunpack.c.l.b16 %v230
    %v267 = vunpack.c.l.b16 %v231
    %v268 = vpack.c.b16 %v253, %v252
    %v269 = vpack.c.b16 %v255, %v254
    %v270 = vpack.c.b16 %v257, %v256
    %v271 = vpack.c.b16 %v259, %v258
    %v272 = vpack.c.b16 %v261, %v260
    %v273 = vpack.c.b16 %v263, %v262
    %v274 = vpack.c.b16 %v265, %v264
    %v275 = vpack.c.b16 %v267, %v266
    %284 = vmatpush.bf16.msra.mxu0 %v275
    %285 = vmatpush.bf16.msra.mxu0 %v274
    %286 = vmatpush.bf16.msra.mxu0 %v273
    %287 = vmatpush.bf16.msra.mxu0 %v272
    %288 = vmatpush.bf16.msra.mxu0 %v271
    %289 = vmatpush.bf16.msra.mxu0 %v270
    %290 = vmatpush.bf16.msra.mxu0 %v269
    %291 = vmatpush.bf16.msra.mxu0 %v268
    %292 = vmatmul.bf16.gmra.mxu0 %v215
    %v293 = vpop.f32.mrf.mxu0
    %v294 = vadd.f32 %v234, %v293
    %v295 = vpop.f32.mrf.mxu0
    %v296 = vadd.f32 %v234, %v295
    %297 = vdwg.mxu0
    %v298 = vand.u32 2147483647, %v294
    %v299 = vand.u32 2147483647, %v296
    %v300 = vsub.f32 0.0, %v298
    %v301 = vsub.f32 0.0, %v299
    %v302 = vmul.f32 %v300, 1.442695
    %v303 = vpow.pop %v302
    %v304 = vmul.f32 %v301, 1.442695
    %v305 = vpow.pop %v304
    %v306 = vadd.f32 %v303, 1.0
    %v307 = vadd.f32 %v305, 1.0
    %v308 = vrcp.pop %v306
    %v309 = vrcp.pop %v307
    %vm310 = vcmp.ge.f32.partialorder %v294, 0.0
    %vm311 = vcmp.ge.f32.partialorder %v296, 0.0
    %v312 = vmul.f32 %v303, %v308
    %v313 = vmul.f32 %v305, %v309
    %v314 = vsel %vm310, %v308, %v312
    %v315 = vsel %vm311, %v309, %v313
    %v316 = vpack.c.bf16 %v314, %v314
    %v317 = vpack.c.bf16 %v315, %v315
    %318 = vst [vmem:[#allocation10] sm:$0xf] %v316
    %319 = vst [vmem:[#allocation10 + $0x4] sm:$0xf] %v317
    // Predicated region
    $region46: #{tpu_custom_call.1} parent=1 // pred_check
      _
    $region47: #{tpu_custom_call.1} parent=1 // pred_check_branch
      %321 = sbr.rel (0) target = $region49
    $region48: #{tpu_custom_call.1} parent=1 // pred_region
      %323 = vsyncadd [#allocation4], 0
      %s324 = sshll.u32 [#allocation10], 4
      %s325 = int_to_ptr.vmem [resolvable:$true] %s324
      %s326 = sshll.u32 %s7, 4
      %s327 = int_to_ptr.hbm [resolvable:$true] %s326
      %332 = dma.vmem_to_hbm [thread:$0]  %s325, 128, %s327, [#allocation4], 64, 64, 4
    $region49: #{tpu_custom_call.1} parent=1 // pred_fallthru
      _
    // Predicated region
    $region50: #{tpu_custom_call.1} parent=1 // pred_check
      _
    $region51: #{tpu_custom_call.1} parent=1 // pred_check_branch
      %334 = sbr.rel (0) target = $region53
    $region52: #{tpu_custom_call.1} parent=1 // pred_region
      %336 = dma.done [#allocation4], 128
    $region53: #{tpu_custom_call.1} parent=1 // pred_fallthru
      _
    %337 = vsyncpa [#allocation3], 1
    %338 = vsyncpa [#allocation6], 1
    %339 = vsyncpa [#allocation9], 1
    %340 = vsyncpa [#allocation4], 1

</llo_original>
